<compile_context>
chip_gen: v5e
topology: v5e:2x2
jax: 0.10.0
libtpu: 0.0.40
codegen_flags: <defaults>
</compile_context>

<pallas_src>
import jax
import jax.numpy as jnp
from jax.experimental import pallas as pl
from jax.experimental.pallas import tpu as pltpu

_LANE = 128
_MAX_DMA_CHUNKS = 4


def _sublane_multiple(dtype) -> int:
    # Sub-32-bit dtypes pack along sublanes: f32 -> 8, bf16 -> 16, int8/fp8 -> 32.
    itemsize = jnp.dtype(dtype).itemsize
    return max(8, 32 // max(itemsize, 1))


def _chunk_plan(n_rows: int, align: int, max_chunks: int):
    """Static (start, size) chunks along axis 0, aligned to `align` rows."""
    if n_rows < max_chunks * align:
        return [(0, n_rows)]
    base = (n_rows // max_chunks) // align * align
    chunks = []
    start = 0
    for i in range(max_chunks):
        size = base if i < max_chunks - 1 else n_rows - start
        chunks.append((start, size))
        start += size
    return chunks


def _make_dma_copy_kernel(chunks):
    """HBM -> HBM identity copy via chunked async DMAs (start all, wait all)."""

    def kernel(x_hbm, o_hbm, sem):
        copies = []
        for idx, (start, size) in enumerate(chunks):
            cp = pltpu.make_async_copy(
                x_hbm.at[pl.ds(start, size)],
                o_hbm.at[pl.ds(start, size)],
                sem.at[idx],
            )
            cp.start()
            copies.append(cp)
        for cp in copies:
            cp.wait()

    return kernel


def _materialize_flat(flat: jax.Array) -> jax.Array:
    """Fresh-buffer copy of `flat` via a direct HBM->HBM DMA Pallas kernel."""
    rows, num_features = flat.shape
    total = rows * num_features
    dtype = flat.dtype
    itemsize = jnp.dtype(dtype).itemsize

    if total % _LANE == 0:
        # Hardware slab view: (total // 128, 128).  Fully contiguous, so chunk
        # boundaries along axis 0 are contiguous HBM ranges.
        slab = flat.reshape(total // _LANE, _LANE)
        chunks = _chunk_plan(total // _LANE, _sublane_multiple(dtype), _MAX_DMA_CHUNKS)
    else:
        # Ragged lane dim: copy the logical (rows, num_features) view in one
        # full-ref DMA.  Still a fresh buffer (no aliasing of the input).
        slab = flat
        chunks = [(0, rows)]

    out = pl.pallas_call(
        _make_dma_copy_kernel(chunks),
        out_shape=jax.ShapeDtypeStruct(slab.shape, dtype),
        in_specs=[pl.BlockSpec(memory_space=pl.ANY)],
        out_specs=pl.BlockSpec(memory_space=pl.ANY),
        scratch_shapes=[pltpu.SemaphoreType.DMA((len(chunks),))],
        cost_estimate=pl.CostEstimate(
            flops=0, transcendentals=0, bytes_accessed=2 * total * itemsize
        ),
    )(slab)
    return out.reshape(rows, num_features)


def flatten_layer(
    x: jax.Array,
    num_features: int,
    materialize: bool = False,
    min_pallas_bytes: int = 1 << 20,
) -> jax.Array:
    """FlattenLayer.forward: x.view(-1, num_features).

    materialize=False (default, preferred): zero-cost XLA reshape — no HBM traffic.
    materialize=True: always returns a fresh buffer.  Arrays smaller than
      `min_pallas_bytes` use a plain XLA copy (custom-call overhead would
      dominate); larger ones go through the HBM->HBM DMA Pallas kernel.
    """
    total = x.size
    assert total % num_features == 0, "num_features must divide total elements"
    rows = total // num_features

    flat = x.reshape(rows, num_features)  # row-major view, same as torch .view
    if not materialize:
        return flat

    if total * jnp.dtype(x.dtype).itemsize < min_pallas_bytes:
        return jnp.copy(flat)  # tiny: XLA copy is bandwidth-optimal, no call overhead
    return _materialize_flat(flat)


if __name__ == "__main__":
    key = jax.random.PRNGKey(0)
    B, C, H, W = 2, 4, 16, 16
    num_features = C * H * W  # 1024

    x = jax.random.normal(key, (B, C, H, W), dtype=jnp.float32)

    # Force the Pallas DMA-copy path even at this small demo size.
    y = flatten_layer(x, num_features, materialize=True, min_pallas_bytes=0)
    y = jax.block_until_ready(y)

    # Reference: exact torch .view(-1, num_features) semantics.
    y_ref = x.reshape(-1, num_features)
    assert y.shape == (B, num_features), y.shape
    assert y.dtype == x.dtype
    assert jnp.array_equal(y, y_ref), "mismatch vs reference flatten"

    # Ragged-lane materialize path (num_features not a multiple of 128) must
    # also produce a correct fresh buffer through the kernel.
    nf2 = 96
    x2 = jax.random.normal(key, (4, nf2), dtype=jnp.float32)
    y2 = flatten_layer(x2, nf2, materialize=True, min_pallas_bytes=0)
    y2 = jax.block_until_ready(y2)
    assert jnp.array_equal(y2, x2.reshape(-1, nf2))

    # Zero-copy (production) path gives identical results.
    y_view = flatten_layer(x, num_features, materialize=False)
    assert jnp.array_equal(y_view, y_ref)

    print("KERNEL_OK")
</pallas_src>

<mosaic_0001>
module attributes {stable_mosaic.version = 11 : i64} {
  func.func @kernel(%arg0: memref<16x128xf32, #tpu.memory_space<any>>, %arg1: memref<16x128xf32, #tpu.memory_space<any>>, %arg2: memref<1x!tpu.dma_semaphore, #tpu.memory_space<semaphore_mem>>) attributes {dimension_semantics = [], scalar_prefetch = 0 : i64, scratch_operands = 1 : i64, tpu.core_type = #tpu.core_type<tc>} {
    %c0_i32 = arith.constant 0 : i32
    %c0_i32_0 = arith.constant 0 : i32
    %c0_i32_1 = arith.constant 0 : i32
    %0 = tpu.memref_slice %arg0[%c0_i32_0, %c0_i32_1] : memref<16x128xf32, #tpu.memory_space<any>> -> memref<16x128xf32, #tpu.memory_space<any>>
    %c0_i32_2 = arith.constant 0 : i32
    %c0_i32_3 = arith.constant 0 : i32
    %1 = tpu.memref_slice %arg1[%c0_i32_2, %c0_i32_3] : memref<16x128xf32, #tpu.memory_space<any>> -> memref<16x128xf32, #tpu.memory_space<any>>
    %2 = tpu.memref_slice %arg2[%c0_i32] : memref<1x!tpu.dma_semaphore, #tpu.memory_space<semaphore_mem>> -> memref<1x!tpu.dma_semaphore, #tpu.memory_space<semaphore_mem>>
    %3 = tpu.memref_squeeze %2 : memref<1x!tpu.dma_semaphore, #tpu.memory_space<semaphore_mem>> -> memref<!tpu.dma_semaphore, #tpu.memory_space<semaphore_mem>>
    tpu.enqueue_dma source(%0 : memref<16x128xf32, #tpu.memory_space<any>>) target(%1 : memref<16x128xf32, #tpu.memory_space<any>>) target_semaphore(%3 : memref<!tpu.dma_semaphore, #tpu.memory_space<semaphore_mem>>)
    %c0_i32_4 = arith.constant 0 : i32
    %c0_i32_5 = arith.constant 0 : i32
    %c0_i32_6 = arith.constant 0 : i32
    %4 = tpu.memref_slice %arg0[%c0_i32_5, %c0_i32_6] : memref<16x128xf32, #tpu.memory_space<any>> -> memref<16x128xf32, #tpu.memory_space<any>>
    %c0_i32_7 = arith.constant 0 : i32
    %c0_i32_8 = arith.constant 0 : i32
    %5 = tpu.memref_slice %arg1[%c0_i32_7, %c0_i32_8] : memref<16x128xf32, #tpu.memory_space<any>> -> memref<16x128xf32, #tpu.memory_space<any>>
    %6 = tpu.memref_slice %arg2[%c0_i32_4] : memref<1x!tpu.dma_semaphore, #tpu.memory_space<semaphore_mem>> -> memref<1x!tpu.dma_semaphore, #tpu.memory_space<semaphore_mem>>
    %7 = tpu.memref_squeeze %6 : memref<1x!tpu.dma_semaphore, #tpu.memory_space<semaphore_mem>> -> memref<!tpu.dma_semaphore, #tpu.memory_space<semaphore_mem>>
    tpu.wait_dma2 semaphore(%7 : memref<!tpu.dma_semaphore, #tpu.memory_space<semaphore_mem>>) src(%4 : memref<16x128xf32, #tpu.memory_space<any>>) dst(%5 : memref<16x128xf32, #tpu.memory_space<any>>)
    return
  }
}

</mosaic_0001>

<llo_original>
// kernel: tpu_custom_call.1
$region0: #{tpu_custom_call.1}
  #allocation0 [shape = 'u32[]', space=smem, size = 0x4, offset = 0x4, fixed_abs, tag = 'smem constant byte address 0x4 - core index']
  #allocation1 [shape = 'u32[72,128]{1,0:T(1,128)}', space=vmem, size = 0x9000, scoped, tag = 'internal scratch']
  #allocation2 [shape = 's32[1]{0}', space=sflag, size = 0x4, scoped, tag = 'scratch operand']
  #allocation3 [shape = 's32[]', space=sflag, size = 0x4, offset = 0, fixed_abs, tag = 'sflag constant byte address 0x0 - dummy sync flag']
  #allocation4 [shape = 'u32[0]{0}', space=smem, size = 0, offset = 0, fixed_abs, tag = 'smem constant byte address 0x0 - null']
  %s0 = inlined_call_operand.hbm [shape: f32[16,128], index: 0, kind: input, shape index: {}]
  %s1 = inlined_call_operand.hbm [shape: f32[16,128], index: 1, kind: output, shape index: {}]
  %s2 = sld [smem:[#allocation0]]
  $region2: #{tpu_custom_call.1} parent=0
    _
  %s4 = ssub.s32 1, %s2
  %s5 = scalar_select 0, %s4, %s2
  %s7 = sshll.u32 1, 14
  %s8 = sxor.u32 4294967295, %s7
  %s10 = sshll.u32 %s0, 4
  %s11 = int_to_ptr.hbm [resolvable:$true] %s10
  %s12 = sshll.u32 %s1, 4
  %s13 = int_to_ptr.hbm [resolvable:$true] %s12
  %16 = dma.general %s11, 256, %s13, [#allocation2], [#allocation3], [#allocation4], 0, 0
  %s17 = smul.u32 16, 1
  %s18 = sshll.u32 %s17, 4
  %19 = dma.done [#allocation2], %s18
  %20 = vsyncmov [#allocation2]
  %s21 = vpop.sfrf %20
  %p22 = scmp.eq.s32.totalorder %s21, 0
  %p23 = pneg %p22
  %25 = shalt.err (%p23)

</llo_original>
